<compile_context>
chip_gen: v6e
topology: v6e:2x2x1
jax: 0.10.0
libtpu: 0.0.40
codegen_flags: <defaults>
</compile_context>

<pallas_src>
import jax
import jax.numpy as jnp
from jax.experimental import pallas as pl
from jax.experimental.pallas import tpu as pltpu


_SMALL_M_FASTPATH = 256            # below this many rows, jnp.sum wins
_TM_CAP = 2048                     # rows/block: past HBM roofline, VMEM friendly
_VMEM_LIMIT_BYTES = 32 * 1024 * 1024   # safe on v5e/v6e/v7x


def _vmem_budget_bytes():
    """Block + in-kernel-temp budget, derived from the chip's VMEM size."""
    cap = 64 * 1024 * 1024         # conservative default (v7x physical VMEM)
    try:
        cap = int(getattr(pltpu.get_tpu_info(), "vmem_capacity_bytes", cap))
    except Exception:
        pass
    return min(24 * 1024 * 1024, (cap * 3) // 8)


def _sublane_multiple(itemsize):
    # f32 -> 8, bf16 -> 16, int8/fp8 -> 32 (sub-32-bit dtypes pack on sublanes)
    return 8 * max(1, 4 // max(int(itemsize), 1))


def _choose_tile_rows(rows, lanes_in, lanes_out, itemsize):
    """Rows per block: big enough for bandwidth, small enough for VMEM,
    balanced across blocks for v7x megacore sharding."""
    sub = _sublane_multiple(itemsize)
    li = pl.cdiv(lanes_in, 128) * 128
    lo = pl.cdiv(lanes_out, 128) * 128
    # double-buffered input + output blocks, plus f32 in-kernel temporaries
    bytes_per_row = 2 * (li + lo) * max(int(itemsize), 1) + (li + 2 * lo) * 4
    tm = _vmem_budget_bytes() // max(bytes_per_row, 1)
    tm = int(min(max(tm, sub), _TM_CAP))
    tm -= tm % sub
    tm = max(tm, sub)
    if rows <= tm:
        return rows                # one block spanning the array (full dims OK)
    # Near-equal blocks so the parallel grid axis shards evenly across cores.
    nblocks = pl.cdiv(rows, tm)
    tm_bal = pl.cdiv(pl.cdiv(rows, nblocks), sub) * sub
    return int(min(tm, max(tm_bal, sub)))


# ----------------------------- packed (MXU) path -----------------------------

def _packed_kernel(q_ref, s_ref, o_ref):
    # q_ref: (tm, G*A*K), s_ref: (G*A*K, G*K) 0/1 selector, o_ref: (tm, G*K).
    # One MXU matmul sums over agents for G packed rows at once; accumulation
    # is f32 on the MXU (exact for a 0/1 selector).
    o_ref[...] = jnp.dot(
        q_ref[...], s_ref[...], preferred_element_type=jnp.float32
    ).astype(o_ref.dtype)


def _make_selector(A, K, G, dtype):
    # S[g*A*K + a*K + k, g*K + k] = 1 : block-diagonal over the G packed rows,
    # summing over the A agents within each packed row.
    per_group = jnp.tile(jnp.eye(K, dtype=dtype), (A, 1))        # (A*K, K)
    return jnp.kron(jnp.eye(G, dtype=dtype), per_group)          # (G*A*K, G*K)


# ------------------------- fallback (roll/slice) path -------------------------

def _make_fallback_kernel(A, K):
    AK = A * K
    use_roll = (A > 1) and ((A & (A - 1)) == 0) and (AK % 128 == 0)

    def kernel(q_ref, o_ref):
        # q_ref: (tm, A*K), o_ref: (tm, K); accumulate in f32 (bf16-safe).
        x = q_ref[...].astype(jnp.float32)
        if use_roll:
            # Roll-tree over agents on the XLU: after log2(A) halving rolls,
            # lanes [0:K) hold the sum over all agents.
            shift = AK // 2
            while shift >= K:
                x = x + pltpu.roll(x, shift=shift, axis=1)
                shift //= 2
            acc = x[:, :K]
        else:
            acc = x[:, 0:K]
            for a in range(1, A):
                acc = acc + x[:, a * K:(a + 1) * K]
        o_ref[...] = acc.astype(o_ref.dtype)

    return kernel


# ---------------------------------- wrapper ----------------------------------

def shapley_vdn_forward(q_values, *, force_kernel=False):
    """q_values: (B, T, A, K) -> (B, T, 1, K), summing over the agent axis."""
    B, T, A, K = q_values.shape
    M = B * T
    AK = A * K
    dtype = q_values.dtype

    # TODO(synk): `.cuda()` in the PyTorch module is a device move; no-op here.

    if M == 0 or A == 0 or K == 0:
        return jnp.zeros((B, T, 1, K), dtype=dtype)

    # Small-M fast path: pallas_call fixed cost dominates below ~256 rows.
    if not force_kernel and M < _SMALL_M_FASTPATH:
        return jnp.sum(q_values, axis=2, keepdims=True)

    G = 128 // K if (K <= 128 and 128 % K == 0) else 1
    packed = (G > 1) and (M % G == 0) and jnp.issubdtype(dtype, jnp.floating)

    if packed:
        rows = M // G
        lanes_in, lanes_out = G * AK, G * K          # lanes_out == 128
        q2d = q_values.reshape(rows, lanes_in)       # free row-major reshape
        sel = _make_selector(A, K, G, dtype)
        tm = _choose_tile_rows(rows, lanes_in, lanes_out, dtype.itemsize)
        out = pl.pallas_call(
            _packed_kernel,
            out_shape=jax.ShapeDtypeStruct((rows, lanes_out), dtype),
            grid=(pl.cdiv(rows, tm),),
            in_specs=[
                pl.BlockSpec((tm, lanes_in), lambda i: (i, 0)),
                pl.BlockSpec((lanes_in, lanes_out), lambda i: (0, 0)),  # resident
            ],
            out_specs=pl.BlockSpec((tm, lanes_out), lambda i: (i, 0)),
            compiler_params=pltpu.CompilerParams(
                dimension_semantics=("parallel",),
                vmem_limit_bytes=_VMEM_LIMIT_BYTES,
            ),
        )(q2d, sel)
        return out.reshape(B, T, 1, K)

    # Fallback: lane-dense (M, A*K) input, (M, K) output.  Only taken when the
    # packed layout does not apply (K >= 128, 128 % K != 0, M % G != 0, ints).
    q2d = q_values.reshape(M, AK)
    tm = _choose_tile_rows(M, AK, K, dtype.itemsize)
    out = pl.pallas_call(
        _make_fallback_kernel(A, K),
        out_shape=jax.ShapeDtypeStruct((M, K), dtype),
        grid=(pl.cdiv(M, tm),),
        in_specs=[pl.BlockSpec((tm, AK), lambda i: (i, 0))],
        out_specs=pl.BlockSpec((tm, K), lambda i: (i, 0)),
        compiler_params=pltpu.CompilerParams(
            dimension_semantics=("parallel",),
            vmem_limit_bytes=_VMEM_LIMIT_BYTES,
        ),
    )(q2d)
    return out.reshape(B, T, 1, K)


if __name__ == "__main__":
    key = jax.random.PRNGKey(0)

    # Small shape consistent with the module: batch=2, seq=8, n_agents=4, q_dim=32.
    B, T, A, K = 2, 8, 4, 32
    q_values = jax.random.normal(key, (B, T, A, K), dtype=jnp.float32)
    ref = jnp.sum(q_values, axis=2, keepdims=True)

    # Force the Pallas kernel even at tiny M so it is exercised and validated.
    out = shapley_vdn_forward(q_values, force_kernel=True)
    jax.block_until_ready(out)
    assert out.shape == (B, T, 1, K), out.shape
    assert jnp.allclose(out, ref, atol=1e-5, rtol=1e-5), "mismatch (packed, small)"

    # Default path (small-M fast path) must agree too.
    out_fast = shapley_vdn_forward(q_values)
    jax.block_until_ready(out_fast)
    assert jnp.allclose(out_fast, ref, atol=1e-5, rtol=1e-5), "mismatch (fast path)"

    # Larger shape: packed lane-dense output, 2 balanced blocks, ragged tail.
    B2, T2 = 5, 2000   # M = 10000 -> Mp = 2500 -> blocks of 1256 / 1244 rows
    q2 = jax.random.normal(jax.random.PRNGKey(1), (B2, T2, A, K), dtype=jnp.float32)
    out2 = shapley_vdn_forward(q2)
    jax.block_until_ready(out2)
    ref2 = jnp.sum(q2, axis=2, keepdims=True)
    assert jnp.allclose(out2, ref2, atol=1e-4, rtol=1e-5), "mismatch (multi-block)"

    # bf16 input, non-power-of-two agents: packed MXU path with f32 accumulation.
    q3 = jax.random.normal(jax.random.PRNGKey(2), (4, 300, 3, 32), dtype=jnp.bfloat16)
    out3 = shapley_vdn_forward(q3)
    jax.block_until_ready(out3)
    ref3 = jnp.sum(q3.astype(jnp.float32), axis=2, keepdims=True)
    assert out3.shape == (4, 300, 1, 32), out3.shape
    assert jnp.allclose(out3.astype(jnp.float32), ref3, atol=5e-2, rtol=2e-2), \
        "mismatch (bf16 packed)"

    # K = 128 exercises the roll-tree fallback path (already lane-dense output).
    q4 = jax.random.normal(jax.random.PRNGKey(3), (2, 200, 4, 128), dtype=jnp.float32)
    out4 = shapley_vdn_forward(q4)
    jax.block_until_ready(out4)
    ref4 = jnp.sum(q4, axis=2, keepdims=True)
    assert jnp.allclose(out4, ref4, atol=1e-5, rtol=1e-5), "mismatch (fallback)"

    print("KERNEL_OK")
</pallas_src>

<mosaic_0001>
module attributes {stable_mosaic.version = 11 : i64} {
  func.func @_packed_kernel(%arg0: i32, %arg1: memref<4x512xf32, #tpu.memory_space<vmem>>, %arg2: memref<512x128xf32, #tpu.memory_space<vmem>>, %arg3: memref<4x128xf32, #tpu.memory_space<vmem>>) attributes {dimension_semantics = [#tpu.dimension_semantics<parallel>], iteration_bounds = array<i64: 1>, scalar_prefetch = 0 : i64, scratch_operands = 0 : i64, tpu.core_type = #tpu.core_type<tc>, window_params = [{transform_indices = @transform_0, window_bounds = array<i64: 4, 512>}, {pipeline_mode = #tpu.pipeline_mode<synchronous>, transform_indices = @transform_1, window_bounds = array<i64: 512, 128>}, {transform_indices = @transform_2, window_bounds = array<i64: 4, 128>}]} {
    %c0 = arith.constant 0 : index
    %c0_0 = arith.constant 0 : index
    %0 = vector.load %arg1[%c0, %c0_0] : memref<4x512xf32, #tpu.memory_space<vmem>>, vector<4x512xf32>
    %c0_1 = arith.constant 0 : index
    %c0_2 = arith.constant 0 : index
    %1 = vector.load %arg2[%c0_1, %c0_2] : memref<512x128xf32, #tpu.memory_space<vmem>>, vector<512x128xf32>
    %cst = arith.constant dense<0.000000e+00> : vector<4x128xf32>
    %2 = tpu.matmul %0, %1, %cst {dimension_numbers = #tpu.dot_dimension_numbers<[1], [0], [0], [1], [0, 0, 1, 1], [], []>} : vector<4x512xf32>, vector<512x128xf32>, vector<4x128xf32> -> vector<4x128xf32>
    %c0_3 = arith.constant 0 : index
    %c0_4 = arith.constant 0 : index
    %3 = vector.load %arg3[%c0_3, %c0_4] : memref<4x128xf32, #tpu.memory_space<vmem>>, vector<4x128xf32>
    tpu.vector_store %arg3[%c0_3, %c0_4], %2 {strides = array<i32>} : memref<4x128xf32, #tpu.memory_space<vmem>>, vector<4x128xf32>,
    return
  }
  func.func @transform_0(%arg0: i32) -> (i32, i32) {
    %c0_i32 = arith.constant 0 : i32
    %c0_i32_0 = arith.constant 0 : i32
    return %arg0, %c0_i32 : i32, i32
  }
  func.func @transform_1(%arg0: i32) -> (i32, i32) {
    %c0_i32 = arith.constant 0 : i32
    %c0_i32_0 = arith.constant 0 : i32
    %c0_i32_1 = arith.constant 0 : i32
    return %c0_i32, %c0_i32_0 : i32, i32
  }
  func.func @transform_2(%arg0: i32) -> (i32, i32) {
    %c0_i32 = arith.constant 0 : i32
    %c0_i32_0 = arith.constant 0 : i32
    return %arg0, %c0_i32 : i32, i32
  }
}

</mosaic_0001>

<llo_original>
// kernel: tpu_custom_call.1
$region0: #{tpu_custom_call.1}
  #allocation0 [shape = 'u32[]', space=smem, size = 0x4, offset = 0x4, fixed_abs, tag = 'smem constant byte address 0x4 - core index']
  #allocation1 [shape = 'u32[144,128]{1,0:T(1,128)}', space=vmem, size = 0x12000, scoped, tag = 'internal scratch']
  %s0 = inlined_call_operand.hbm [shape: f32[4,512], index: 0, kind: input, shape index: {}]
  %s1 = inlined_call_operand.hbm [shape: f32[512,128], index: 1, kind: input, shape index: {}]
  %s2 = inlined_call_operand.hbm [shape: f32[4,128], index: 2, kind: output, shape index: {}]
  %s3 = sld [smem:[#allocation0]]
  $region26: #{tpu_custom_call.1} parent=0
    _
  %s5 = ssub.s32 1, %s3
  %s6 = scalar_select 0, %s5, %s3
  $region1: #{tpu_custom_call.1} parent=0
    #allocation2 [shape = 'u8[8192]{0}', space=vmem, size = 0x2000, scoped, tag = 'input window, operand 0, single buffered']
    #allocation3 [shape = 's32[1]{0}', space=sflag, size = 0x4, scoped, tag = 'scoped memory for tpu_custom_call.1']
    #allocation4 [shape = 's32[1]{0}', space=sflag, size = 0x4, scoped, tag = 'scoped memory for tpu_custom_call.1']
    #allocation5 [shape = 'u8[262144]{0}', space=vmem, size = 0x40000, scoped, tag = 'input window, operand 1, single buffered']
    #allocation6 [shape = 's32[1]{0}', space=sflag, size = 0x4, scoped, tag = 'scoped memory for tpu_custom_call.1']
    #allocation7 [shape = 'u8[2048]{0}', space=vmem, size = 0x800, scoped, tag = 'output window, operand 0, single buffered']
    %7 = vsyncpa [#allocation3], 0
    %8 = vsyncpa [#allocation6], 0
    %9 = vsyncpa [#allocation4], 0
    // Predicated region
    $region2: #{tpu_custom_call.1} parent=1 // pred_check
      _
    $region3: #{tpu_custom_call.1} parent=1 // pred_check_branch
      %11 = sbr.rel (0) target = $region5
    $region4: #{tpu_custom_call.1} parent=1 // pred_region
      %s13 = ssub.s32 256, 256
      %14 = vsyncadd [#allocation3], %s13
      %s16 = sshll.u32 [#allocation2], 4
      %s17 = int_to_ptr.vmem [resolvable:$true] %s16
      %19 = dma.hbm_to_vmem [thread:$0]  %s0, 256, %s17, [#allocation3]
    $region5: #{tpu_custom_call.1} parent=1 // pred_fallthru
      _
    // Predicated region
    $region6: #{tpu_custom_call.1} parent=1 // pred_check
      _
    $region7: #{tpu_custom_call.1} parent=1 // pred_check_branch
      %21 = sbr.rel (0) target = $region9
    $region8: #{tpu_custom_call.1} parent=1 // pred_region
      %s23 = ssub.s32 8192, 8192
      %24 = vsyncadd [#allocation6], %s23
      %s25 = sshll.u32 [#allocation5], 4
      %s26 = int_to_ptr.vmem [resolvable:$true] %s25
      %31 = dma.hbm_to_vmem [thread:$0]  %s1, 8192, %s26, [#allocation6], 128, 128, 8
    $region9: #{tpu_custom_call.1} parent=1 // pred_fallthru
      _
    // Predicated region
    $region10: #{tpu_custom_call.1} parent=1 // pred_check
      _
    $region11: #{tpu_custom_call.1} parent=1 // pred_check_branch
      %33 = sbr.rel (0) target = $region13
    $region12: #{tpu_custom_call.1} parent=1 // pred_region
      %34 = dma.done [#allocation3], 256
    $region13: #{tpu_custom_call.1} parent=1 // pred_fallthru
      _
    // Predicated region
    $region14: #{tpu_custom_call.1} parent=1 // pred_check
      _
    $region15: #{tpu_custom_call.1} parent=1 // pred_check_branch
      %36 = sbr.rel (0) target = $region17
    $region16: #{tpu_custom_call.1} parent=1 // pred_region
      %37 = dma.done [#allocation6], 8192
    $region17: #{tpu_custom_call.1} parent=1 // pred_fallthru
      _
    %v38 = vld [vmem:[#allocation2] sm:$0xff]
    %v39 = vld [vmem:[#allocation2 + $0x8] sm:$0xff]
    %v40 = vld [vmem:[#allocation5] sm:$0xff]
    %v41 = vld [vmem:[#allocation5 + $0x8] sm:$0xff]
    %v42 = vld [vmem:[#allocation5 + $0x10] sm:$0xff]
    %v43 = vld [vmem:[#allocation5 + $0x18] sm:$0xff]
    %v44 = vld [vmem:[#allocation5 + $0x20] sm:$0xff]
    %v45 = vld [vmem:[#allocation5 + $0x28] sm:$0xff]
    %v46 = vld [vmem:[#allocation5 + $0x30] sm:$0xff]
    %v47 = vld [vmem:[#allocation5 + $0x38] sm:$0xff]
    %v48 = vld [vmem:[#allocation5 + $0x40] sm:$0xff]
    %v49 = vld [vmem:[#allocation5 + $0x48] sm:$0xff]
    %v50 = vld [vmem:[#allocation5 + $0x50] sm:$0xff]
    %v51 = vld [vmem:[#allocation5 + $0x58] sm:$0xff]
    %v52 = vld [vmem:[#allocation5 + $0x60] sm:$0xff]
    %v53 = vld [vmem:[#allocation5 + $0x68] sm:$0xff]
    %v54 = vld [vmem:[#allocation5 + $0x70] sm:$0xff]
    %v55 = vld [vmem:[#allocation5 + $0x78] sm:$0xff]
    %v56 = vld [vmem:[#allocation5 + $0x80] sm:$0xff]
    %v57 = vld [vmem:[#allocation5 + $0x88] sm:$0xff]
    %v58 = vld [vmem:[#allocation5 + $0x90] sm:$0xff]
    %v59 = vld [vmem:[#allocation5 + $0x98] sm:$0xff]
    %v60 = vld [vmem:[#allocation5 + $0xa0] sm:$0xff]
    %v61 = vld [vmem:[#allocation5 + $0xa8] sm:$0xff]
    %v62 = vld [vmem:[#allocation5 + $0xb0] sm:$0xff]
    %v63 = vld [vmem:[#allocation5 + $0xb8] sm:$0xff]
    %v64 = vld [vmem:[#allocation5 + $0xc0] sm:$0xff]
    %v65 = vld [vmem:[#allocation5 + $0xc8] sm:$0xff]
    %v66 = vld [vmem:[#allocation5 + $0xd0] sm:$0xff]
    %v67 = vld [vmem:[#allocation5 + $0xd8] sm:$0xff]
    %v68 = vld [vmem:[#allocation5 + $0xe0] sm:$0xff]
    %v69 = vld [vmem:[#allocation5 + $0xe8] sm:$0xff]
    %v70 = vld [vmem:[#allocation5 + $0xf0] sm:$0xff]
    %v71 = vld [vmem:[#allocation5 + $0xf8] sm:$0xff]
    %v72 = vld [vmem:[#allocation5 + $0x100] sm:$0xff]
    %v73 = vld [vmem:[#allocation5 + $0x108] sm:$0xff]
    %v74 = vld [vmem:[#allocation5 + $0x110] sm:$0xff]
    %v75 = vld [vmem:[#allocation5 + $0x118] sm:$0xff]
    %v76 = vld [vmem:[#allocation5 + $0x120] sm:$0xff]
    %v77 = vld [vmem:[#allocation5 + $0x128] sm:$0xff]
    %v78 = vld [vmem:[#allocation5 + $0x130] sm:$0xff]
    %v79 = vld [vmem:[#allocation5 + $0x138] sm:$0xff]
    %v80 = vld [vmem:[#allocation5 + $0x140] sm:$0xff]
    %v81 = vld [vmem:[#allocation5 + $0x148] sm:$0xff]
    %v82 = vld [vmem:[#allocation5 + $0x150] sm:$0xff]
    %v83 = vld [vmem:[#allocation5 + $0x158] sm:$0xff]
    %v84 = vld [vmem:[#allocation5 + $0x160] sm:$0xff]
    %v85 = vld [vmem:[#allocation5 + $0x168] sm:$0xff]
    %v86 = vld [vmem:[#allocation5 + $0x170] sm:$0xff]
    %v87 = vld [vmem:[#allocation5 + $0x178] sm:$0xff]
    %v88 = vld [vmem:[#allocation5 + $0x180] sm:$0xff]
    %v89 = vld [vmem:[#allocation5 + $0x188] sm:$0xff]
    %v90 = vld [vmem:[#allocation5 + $0x190] sm:$0xff]
    %v91 = vld [vmem:[#allocation5 + $0x198] sm:$0xff]
    %v92 = vld [vmem:[#allocation5 + $0x1a0] sm:$0xff]
    %v93 = vld [vmem:[#allocation5 + $0x1a8] sm:$0xff]
    %v94 = vld [vmem:[#allocation5 + $0x1b0] sm:$0xff]
    %v95 = vld [vmem:[#allocation5 + $0x1b8] sm:$0xff]
    %v96 = vld [vmem:[#allocation5 + $0x1c0] sm:$0xff]
    %v97 = vld [vmem:[#allocation5 + $0x1c8] sm:$0xff]
    %v98 = vld [vmem:[#allocation5 + $0x1d0] sm:$0xff]
    %v99 = vld [vmem:[#allocation5 + $0x1d8] sm:$0xff]
    %v100 = vld [vmem:[#allocation5 + $0x1e0] sm:$0xff]
    %v101 = vld [vmem:[#allocation5 + $0x1e8] sm:$0xff]
    %v102 = vld [vmem:[#allocation5 + $0x1f0] sm:$0xff]
    %v103 = vld [vmem:[#allocation5 + $0x1f8] sm:$0xff]
    %v106 = vcombine.high %v38, %v38
    %v107 = vcombine.high %v39, %v39
    %110 = vmatprep.subr.mxu0 0.0
    %111 = vmatpush1.msra.mxu0 %v55
    %112 = vmatprep.subr.mxu0 0.0
    %113 = vmatpush1.msra.mxu0 %v54
    %114 = vmatprep.subr.mxu0 0.0
    %115 = vmatpush1.msra.mxu0 %v53
    %116 = vmatprep.subr.mxu0 0.0
    %117 = vmatpush1.msra.mxu0 %v52
    %118 = vmatprep.subr.mxu0 0.0
    %119 = vmatpush1.msra.mxu0 %v51
    %120 = vmatprep.subr.mxu0 0.0
    %121 = vmatpush1.msra.mxu0 %v50
    %122 = vmatprep.subr.mxu0 0.0
    %123 = vmatpush1.msra.mxu0 %v49
    %124 = vmatprep.subr.mxu0 0.0
    %125 = vmatpush1.msra.mxu0 %v48
    %126 = vmatprep.subr.mxu0 0.0
    %127 = vmatpush1.msra.mxu0 %v47
    %128 = vmatprep.subr.mxu0 0.0
    %129 = vmatpush1.msra.mxu0 %v46
    %130 = vmatprep.subr.mxu0 0.0
    %131 = vmatpush1.msra.mxu0 %v45
    %132 = vmatprep.subr.mxu0 0.0
    %133 = vmatpush1.msra.mxu0 %v44
    %134 = vmatprep.subr.mxu0 0.0
    %135 = vmatpush1.msra.mxu0 %v43
    %136 = vmatprep.subr.mxu0 0.0
    %137 = vmatpush1.msra.mxu0 %v42
    %138 = vmatprep.subr.mxu0 0.0
    %139 = vmatpush1.msra.mxu0 %v41
    %140 = vmatprep.subr.mxu0 0.0
    %141 = vmatpush1.msra.mxu0 %v40
    %142 = vmatprep.subr.mxu0 0.0
    %143 = vmatpush2.msra.mxu0 %v71
    %144 = vmatprep.subr.mxu0 0.0
    %145 = vmatpush2.msra.mxu0 %v70
    %146 = vmatprep.subr.mxu0 0.0
    %147 = vmatpush2.msra.mxu0 %v69
    %148 = vmatprep.subr.mxu0 0.0
    %149 = vmatpush2.msra.mxu0 %v68
    %150 = vmatprep.subr.mxu0 0.0
    %151 = vmatpush2.msra.mxu0 %v67
    %152 = vmatprep.subr.mxu0 0.0
    %153 = vmatpush2.msra.mxu0 %v66
    %154 = vmatprep.subr.mxu0 0.0
    %155 = vmatpush2.msra.mxu0 %v65
    %156 = vmatprep.subr.mxu0 0.0
    %157 = vmatpush2.msra.mxu0 %v64
    %158 = vmatprep.subr.mxu0 0.0
    %159 = vmatpush2.msra.mxu0 %v63
    %160 = vmatprep.subr.mxu0 0.0
    %161 = vmatpush2.msra.mxu0 %v62
    %162 = vmatprep.subr.mxu0 0.0
    %163 = vmatpush2.msra.mxu0 %v61
    %164 = vmatprep.subr.mxu0 0.0
    %165 = vmatpush2.msra.mxu0 %v60
    %166 = vmatprep.subr.mxu0 0.0
    %167 = vmatpush2.msra.mxu0 %v59
    %168 = vmatprep.subr.mxu0 0.0
    %169 = vmatpush2.msra.mxu0 %v58
    %170 = vmatprep.subr.mxu0 0.0
    %171 = vmatpush2.msra.mxu0 %v57
    %172 = vmatprep.subr.mxu0 0.0
    %173 = vmatpush2.msra.mxu0 %v56
    %174 = vmatprep.mubr.f32.mxu0 %v106
    %175 = vmatmul.mubr.f32.gmra.mxu0 %v38
    %v176 = vpop.f32.mrf.mxu0
    %v177 = vadd.f32 0.0, %v176
    %v178 = vpop.f32.mrf.mxu0
    %179 = vdwg.mxu0
    %180 = vmatprep.subr.mxu0 0.0
    %181 = vmatpush1.msra.mxu0 %v87
    %182 = vmatprep.subr.mxu0 0.0
    %183 = vmatpush1.msra.mxu0 %v86
    %184 = vmatprep.subr.mxu0 0.0
    %185 = vmatpush1.msra.mxu0 %v85
    %186 = vmatprep.subr.mxu0 0.0
    %187 = vmatpush1.msra.mxu0 %v84
    %188 = vmatprep.subr.mxu0 0.0
    %189 = vmatpush1.msra.mxu0 %v83
    %190 = vmatprep.subr.mxu0 0.0
    %191 = vmatpush1.msra.mxu0 %v82
    %192 = vmatprep.subr.mxu0 0.0
    %193 = vmatpush1.msra.mxu0 %v81
    %194 = vmatprep.subr.mxu0 0.0
    %195 = vmatpush1.msra.mxu0 %v80
    %196 = vmatprep.subr.mxu0 0.0
    %197 = vmatpush1.msra.mxu0 %v79
    %198 = vmatprep.subr.mxu0 0.0
    %199 = vmatpush1.msra.mxu0 %v78
    %200 = vmatprep.subr.mxu0 0.0
    %201 = vmatpush1.msra.mxu0 %v77
    %202 = vmatprep.subr.mxu0 0.0
    %203 = vmatpush1.msra.mxu0 %v76
    %204 = vmatprep.subr.mxu0 0.0
    %205 = vmatpush1.msra.mxu0 %v75
    %206 = vmatprep.subr.mxu0 0.0
    %207 = vmatpush1.msra.mxu0 %v74
    %208 = vmatprep.subr.mxu0 0.0
    %209 = vmatpush1.msra.mxu0 %v73
    %210 = vmatprep.subr.mxu0 0.0
    %211 = vmatpush1.msra.mxu0 %v72
    %212 = vmatprep.subr.mxu0 0.0
    %213 = vmatpush2.msra.mxu0 %v103
    %214 = vmatprep.subr.mxu0 0.0
    %215 = vmatpush2.msra.mxu0 %v102
    %216 = vmatprep.subr.mxu0 0.0
    %217 = vmatpush2.msra.mxu0 %v101
    %218 = vmatprep.subr.mxu0 0.0
    %219 = vmatpush2.msra.mxu0 %v100
    %220 = vmatprep.subr.mxu0 0.0
    %221 = vmatpush2.msra.mxu0 %v99
    %222 = vmatprep.subr.mxu0 0.0
    %223 = vmatpush2.msra.mxu0 %v98
    %224 = vmatprep.subr.mxu0 0.0
    %225 = vmatpush2.msra.mxu0 %v97
    %226 = vmatprep.subr.mxu0 0.0
    %227 = vmatpush2.msra.mxu0 %v96
    %228 = vmatprep.subr.mxu0 0.0
    %229 = vmatpush2.msra.mxu0 %v95
    %230 = vmatprep.subr.mxu0 0.0
    %231 = vmatpush2.msra.mxu0 %v94
    %232 = vmatprep.subr.mxu0 0.0
    %233 = vmatpush2.msra.mxu0 %v93
    %234 = vmatprep.subr.mxu0 0.0
    %235 = vmatpush2.msra.mxu0 %v92
    %236 = vmatprep.subr.mxu0 0.0
    %237 = vmatpush2.msra.mxu0 %v91
    %238 = vmatprep.subr.mxu0 0.0
    %239 = vmatpush2.msra.mxu0 %v90
    %240 = vmatprep.subr.mxu0 0.0
    %241 = vmatpush2.msra.mxu0 %v89
    %242 = vmatprep.subr.mxu0 0.0
    %243 = vmatpush2.msra.mxu0 %v88
    %244 = vmatprep.mubr.f32.mxu0 %v107
    %245 = vmatmul.mubr.f32.gmra.mxu0 %v39
    %v246 = vpop.f32.mrf.mxu0
    %v247 = vadd.f32 %v177, %v246
    %v248 = vpop.f32.mrf.mxu0
    %249 = vdwg.mxu0
    %250 = vst [vmem:[#allocation7] sm:$0xf] %v247
    // Predicated region
    $region18: #{tpu_custom_call.1} parent=1 // pred_check
      _
    $region19: #{tpu_custom_call.1} parent=1 // pred_check_branch
      %252 = sbr.rel (0) target = $region21
    $region20: #{tpu_custom_call.1} parent=1 // pred_region
      %s254 = ssub.s32 64, 64
      %255 = vsyncadd [#allocation4], %s254
      %s257 = sshll.u32 [#allocation7], 4
      %s258 = int_to_ptr.vmem [resolvable:$true] %s257
      %260 = dma.vmem_to_hbm [thread:$0]  %s258, 64, %s2, [#allocation4]
    $region21: #{tpu_custom_call.1} parent=1 // pred_fallthru
      _
    // Predicated region
    $region22: #{tpu_custom_call.1} parent=1 // pred_check
      _
    $region23: #{tpu_custom_call.1} parent=1 // pred_check_branch
      %262 = sbr.rel (0) target = $region25
    $region24: #{tpu_custom_call.1} parent=1 // pred_region
      %263 = dma.done [#allocation4], 64
    $region25: #{tpu_custom_call.1} parent=1 // pred_fallthru
      _
    %264 = vsyncpa [#allocation3], 1
    %265 = vsyncpa [#allocation6], 1
    %266 = vsyncpa [#allocation4], 1

</llo_original>
